<compile_context>
chip_gen: v6e
topology: v6e:2x2x1
jax: 0.10.0
libtpu: 0.0.40
codegen_flags: <defaults>
</compile_context>

<pallas_src>
import functools

import jax
import jax.numpy as jnp
from jax.experimental import pallas as pl
from jax.experimental.pallas import tpu as pltpu

BN_EPS = 1e-5
LEAKY_SLOPE = 0.01


def _round_up(a: int, b: int) -> int:
    return (a + b - 1) // b * b


def _pad2(a, rows: int, cols: int):
    pr, pc = rows - a.shape[0], cols - a.shape[1]
    if pr == 0 and pc == 0:
        return a                      # skip the extra HBM pass when aligned
    return jnp.pad(a, ((0, pr), (0, pc)))


def _vmem_capacity_bytes() -> int:
    try:
        return int(pltpu.get_tpu_info().vmem_capacity_bytes)
    except Exception:
        return 64 * 2**20             # v7x per-TC size: safe lower bound


def _linear_block_kernel(x_ref, w_ref, gb_ref, o_ref, *, inv_n, n_valid):
    """Grid = (C_out tiles, K tiles); K (reduction) is the innermost axis."""
    k = pl.program_id(1)
    nk = pl.num_programs(1)

    # ---- Linear: x_tile @ W_tile on the MXU, f32 accumulation directly into
    # the revisited output block (no separate accumulator scratch).
    partial = jnp.dot(x_ref[...], w_ref[...],
                      preferred_element_type=jnp.float32)

    @pl.when(k == 0)
    def _():
        o_ref[...] = partial

    @pl.when(k > 0)
    def _():
        o_ref[...] += partial

    # ---- finalize: BatchNorm1d (training batch stats) + LeakyReLU, in place.
    @pl.when(k == nk - 1)
    def _():
        y = o_ref[...]                                     # (n_p, tn) f32
        mean = jnp.sum(y, axis=0, keepdims=True) * inv_n   # padded rows are 0
        centered = y - mean
        if y.shape[0] != n_valid:                          # mask padded rows
            row = jax.lax.broadcasted_iota(jnp.int32, y.shape, 0)
            centered = jnp.where(row < n_valid, centered, 0.0)
        # Two-pass (centered) variance: robust when |mean| >> std.
        var = jnp.sum(centered * centered, axis=0, keepdims=True) * inv_n
        gamma = gb_ref[0:1, :]
        beta = gb_ref[1:2, :]
        scale = gamma * jax.lax.rsqrt(var + BN_EPS)
        shift = beta - mean * scale
        out = y * scale + shift
        o_ref[...] = jnp.where(out >= 0, out, LEAKY_SLOPE * out)


def make_linear_block(w, b, gamma, beta, *, compute_dtype=jnp.bfloat16, tn=256):
    """One-time parameter prep; returns apply(x) = LeakyReLU(BN(x @ W + b)).

    w: (C_in, C_out); b/gamma/beta: (C_out,) or (1, C_out). Training-mode BN
    only: the Linear bias is exactly cancelled by the batch-mean subtraction
    and is therefore never loaded by the kernel.
    """
    w = jnp.asarray(w)
    C_in, C_out = w.shape
    del b  # exactly cancelled by train-mode BN's mean subtraction
    gamma = jnp.asarray(gamma, jnp.float32).reshape(1, -1)
    beta = jnp.asarray(beta, jnp.float32).reshape(1, -1)

    # Lane-dense C_out tiles; prefer >=2 tiles so v7x's two TensorCores both
    # get "parallel" work (harmless on single-TC v5e/v6e).
    tn = min(tn, _round_up(C_out, 128))
    m_p = _round_up(C_out, tn)
    if m_p // tn < 2 and m_p >= 256:
        tn = 128
        m_p = _round_up(C_out, tn)

    # Pad K so every candidate K tile (whole-K or 512) divides it exactly.
    k_p = _round_up(C_in, 128) if C_in <= 512 else _round_up(C_in, 512)
    xbytes = jnp.dtype(compute_dtype).itemsize

    # Hoisted (one-time) parameter prep: cast/pad W to the MXU compute dtype,
    # merge gamma|beta into one (2, m_p) array -> a single tiny DMA per tile.
    w_p = _pad2(w.astype(compute_dtype), k_p, m_p)
    gb_p = _pad2(jnp.concatenate([gamma, beta], axis=0), 2, m_p)

    @jax.jit
    def _apply(x, w_p, gb_p):
        N, c_in = x.shape
        assert c_in == C_in, (c_in, C_in)
        n_p = _round_up(max(N, 8), 8)
        # Zero padding is exact: padded K rows/cols contribute nothing to the
        # matmul; padded batch rows are all-zero (no in-kernel bias) and are
        # masked out of the variance; padded C_out columns are sliced off.
        x_p = _pad2(x.astype(compute_dtype), n_p, k_p)

        vmem_cap = _vmem_capacity_bytes()
        budget = min(int(0.45 * vmem_cap), 28 * 2**20)

        def working_set(tk_):
            return (2 * n_p * tk_ * xbytes      # x (double-buffered)
                    + 2 * tk_ * tn * xbytes     # W
                    + 2 * 8 * tn * 4            # gamma|beta (sublane-padded)
                    + 2 * n_p * tn * 4)         # output tile (in-place acc)

        # Whole-K tile when it fits: x's block index is then constant, so the
        # activation is DMA'd exactly once instead of once per C_out tile.
        tk = k_p
        if k_p > 512 and working_set(k_p) > budget:
            tk = 512
        # TODO(synk): N-tiling + two-phase BN for batches that exceed VMEM.

        grid = (m_p // tn, k_p // tk)
        needed = working_set(tk)
        vmem_limit = int(min(int(0.85 * vmem_cap),
                             max(2 * needed, 32 * 2**20)))

        kernel = functools.partial(_linear_block_kernel,
                                   inv_n=1.0 / float(N), n_valid=N)

        cost = pl.CostEstimate(
            flops=2 * N * C_in * C_out,
            transcendentals=C_out,
            bytes_accessed=(x_p.size * xbytes + w_p.size * xbytes
                            + gb_p.size * 4 + n_p * m_p * 4))

        out_p = pl.pallas_call(
            kernel,
            out_shape=jax.ShapeDtypeStruct((n_p, m_p), jnp.float32),
            grid_spec=pltpu.PrefetchScalarGridSpec(
                num_scalar_prefetch=0,
                grid=grid,
                in_specs=[
                    pl.BlockSpec((n_p, tk), lambda j, k: (0, k)),   # x
                    pl.BlockSpec((tk, tn), lambda j, k: (k, j)),    # W
                    pl.BlockSpec((2, tn), lambda j, k: (0, j)),     # gamma|beta
                ],
                out_specs=pl.BlockSpec((n_p, tn), lambda j, k: (0, j)),
            ),
            compiler_params=pltpu.CompilerParams(
                dimension_semantics=("parallel", "arbitrary"),
                vmem_limit_bytes=vmem_limit,
            ),
            cost_estimate=cost,
        )(x_p, w_p, gb_p)

        return out_p[:N, :C_out]

    def apply(x):
        return _apply(x, w_p, gb_p)

    return apply


def linear_block(x, w, b, gamma, beta, **kwargs):
    """Convenience one-shot wrapper (prefer make_linear_block for reuse)."""
    return make_linear_block(w, b, gamma, beta, **kwargs)(x)


def reference(x, w, b, gamma, beta, compute_dtype=jnp.float32):
    """Pure-JAX reference matching PyTorch LinearBlock.forward (training mode)."""
    y = jnp.dot(x.astype(compute_dtype), w.astype(compute_dtype),
                preferred_element_type=jnp.float32)
    y = y + jnp.asarray(b, jnp.float32).reshape(1, -1)
    mean = jnp.mean(y, axis=0, keepdims=True)
    var = jnp.mean((y - mean) ** 2, axis=0, keepdims=True)   # biased variance
    g = jnp.asarray(gamma, jnp.float32).reshape(1, -1)
    be = jnp.asarray(beta, jnp.float32).reshape(1, -1)
    out = (y - mean) * jax.lax.rsqrt(var + BN_EPS) * g + be
    return jnp.where(out >= 0, out, LEAKY_SLOPE * out)


if __name__ == "__main__":
    key = jax.random.PRNGKey(0)

    def make_inputs(case_key, N, C_in, C_out):
        k_x, k_w, k_b, k_g, k_be = jax.random.split(case_key, 5)
        x = jax.random.normal(k_x, (N, C_in), jnp.float32)
        bound = 1.0 / (C_in ** 0.5)            # PyTorch Linear default init
        w = jax.random.uniform(k_w, (C_in, C_out), jnp.float32, -bound, bound)
        b = jax.random.uniform(k_b, (1, C_out), jnp.float32, -bound, bound)
        gamma = 1.0 + 0.1 * jax.random.normal(k_g, (1, C_out), jnp.float32)
        beta = 0.1 * jax.random.normal(k_be, (1, C_out), jnp.float32)
        return x, w, b, gamma, beta

    k1, k2 = jax.random.split(key)

    # Case 1: small shapes implied by the module; exact f32 operand path.
    x, w, b, gamma, beta = make_inputs(k1, 8, 32, 64)
    out = jax.block_until_ready(
        linear_block(x, w, b, gamma, beta, compute_dtype=jnp.float32))
    ref = reference(x, w, b, gamma, beta)
    assert out.shape == (8, 64)
    err = float(jnp.max(jnp.abs(out - ref)))
    assert jnp.allclose(out, ref, atol=1e-4, rtol=1e-4), err

    # Case 2: default bf16 MXU path; exercises K accumulation, two C_out tiles
    # (v7x megacore split) and the hoisted-parameter factory.
    x, w, b, gamma, beta = make_inputs(k2, 16, 384, 256)
    block = make_linear_block(w, b, gamma, beta)        # params prepped once
    out = jax.block_until_ready(block(x))
    assert out.shape == (16, 256)
    ref_bf16 = reference(x, w, b, gamma, beta, compute_dtype=jnp.bfloat16)
    ref_f32 = reference(x, w, b, gamma, beta)
    err_bf16 = float(jnp.max(jnp.abs(out - ref_bf16)))
    err_f32 = float(jnp.max(jnp.abs(out - ref_f32)))
    assert jnp.allclose(out, ref_bf16, atol=2e-3, rtol=2e-3), err_bf16
    assert jnp.allclose(out, ref_f32, atol=3e-2, rtol=3e-2), err_f32  # bf16 rounding

    print("KERNEL_OK")
</pallas_src>

<mosaic_0001>
module attributes {stable_mosaic.version = 11 : i64} {
  func.func @_linear_block_kernel(%arg0: i32, %arg1: i32, %arg2: memref<8x128xf32, #tpu.memory_space<vmem>>, %arg3: memref<128x128xf32, #tpu.memory_space<vmem>>, %arg4: memref<2x128xf32, #tpu.memory_space<vmem>>, %arg5: memref<8x128xf32, #tpu.memory_space<vmem>>) attributes {dimension_semantics = [#tpu.dimension_semantics<parallel>, #tpu.dimension_semantics<arbitrary>], iteration_bounds = array<i64: 1, 1>, scalar_prefetch = 0 : i64, scratch_operands = 0 : i64, tpu.core_type = #tpu.core_type<tc>, window_params = [{transform_indices = @transform_0, window_bounds = array<i64: 8, 128>}, {transform_indices = @transform_1, window_bounds = array<i64: 128, 128>}, {transform_indices = @transform_2, window_bounds = array<i64: 2, 128>}, {transform_indices = @transform_3, window_bounds = array<i64: 8, 128>}]} {
    %c0 = arith.constant 0 : index
    %c0_0 = arith.constant 0 : index
    %0 = vector.load %arg2[%c0, %c0_0] : memref<8x128xf32, #tpu.memory_space<vmem>>, vector<8x128xf32>
    %c0_1 = arith.constant 0 : index
    %c0_2 = arith.constant 0 : index
    %1 = vector.load %arg3[%c0_1, %c0_2] : memref<128x128xf32, #tpu.memory_space<vmem>>, vector<128x128xf32>
    %cst = arith.constant dense<0.000000e+00> : vector<8x128xf32>
    %2 = tpu.matmul %0, %1, %cst {dimension_numbers = #tpu.dot_dimension_numbers<[1], [0], [0], [1], [0, 0, 1, 1], [], []>} : vector<8x128xf32>, vector<128x128xf32>, vector<8x128xf32> -> vector<8x128xf32>
    %c0_i32 = arith.constant 0 : i32
    %3 = arith.cmpi eq, %arg1, %c0_i32 : i32
    %4 = arith.extui %3 : i1 to i32
    %c0_i32_3 = arith.constant 0 : i32
    %5 = arith.cmpi ne, %4, %c0_i32_3 : i32
    scf.if %5 {
      %c0_8 = arith.constant 0 : index
      %c0_9 = arith.constant 0 : index
      %12 = vector.load %arg5[%c0_8, %c0_9] : memref<8x128xf32, #tpu.memory_space<vmem>>, vector<8x128xf32>
      tpu.vector_store %arg5[%c0_8, %c0_9], %2 {strides = array<i32>} : memref<8x128xf32, #tpu.memory_space<vmem>>, vector<8x128xf32>,
    } else {
    }
    %c0_i32_4 = arith.constant 0 : i32
    %6 = arith.cmpi sgt, %arg1, %c0_i32_4 : i32
    %7 = arith.extui %6 : i1 to i32
    %c0_i32_5 = arith.constant 0 : i32
    %8 = arith.cmpi ne, %7, %c0_i32_5 : i32
    scf.if %8 {
      %c0_8 = arith.constant 0 : index
      %c0_9 = arith.constant 0 : index
      %12 = vector.load %arg5[%c0_8, %c0_9] : memref<8x128xf32, #tpu.memory_space<vmem>>, vector<8x128xf32>
      %13 = arith.addf %12, %2 : vector<8x128xf32>
      %c0_10 = arith.constant 0 : index
      %c0_11 = arith.constant 0 : index
      %14 = vector.load %arg5[%c0_10, %c0_11] : memref<8x128xf32, #tpu.memory_space<vmem>>, vector<8x128xf32>
      tpu.vector_store %arg5[%c0_10, %c0_11], %13 {strides = array<i32>} : memref<8x128xf32, #tpu.memory_space<vmem>>, vector<8x128xf32>,
    } else {
    }
    %c0_i32_6 = arith.constant 0 : i32
    %9 = arith.cmpi eq, %arg1, %c0_i32_6 : i32
    %10 = arith.extui %9 : i1 to i32
    %c0_i32_7 = arith.constant 0 : i32
    %11 = arith.cmpi ne, %10, %c0_i32_7 : i32
    scf.if %11 {
      %c0_8 = arith.constant 0 : index
      %c0_9 = arith.constant 0 : index
      %12 = vector.load %arg5[%c0_8, %c0_9] : memref<8x128xf32, #tpu.memory_space<vmem>>, vector<8x128xf32>
      %cst_10 = arith.constant dense<0.000000e+00> : vector<128xf32>
      %13 = vector.multi_reduction <add>, %12, %cst_10 [0] : vector<8x128xf32> to vector<128xf32>
      %14 = vector.shape_cast %13 : vector<128xf32> to vector<1x128xf32>
      %cst_11 = arith.constant 1.250000e-01 : f32
      %15 = vector.broadcast %cst_11 : f32 to vector<1x128xf32>
      %16 = arith.mulf %14, %15 : vector<1x128xf32>
      %17 = vector.broadcast %16 : vector<1x128xf32> to vector<8x128xf32>
      %18 = arith.subf %12, %17 : vector<8x128xf32>
      %19 = arith.mulf %18, %18 : vector<8x128xf32>
      %cst_12 = arith.constant dense<0.000000e+00> : vector<128xf32>
      %20 = vector.multi_reduction <add>, %19, %cst_12 [0] : vector<8x128xf32> to vector<128xf32>
      %21 = vector.shape_cast %20 : vector<128xf32> to vector<1x128xf32>
      %cst_13 = arith.constant 1.250000e-01 : f32
      %22 = vector.broadcast %cst_13 : f32 to vector<1x128xf32>
      %23 = arith.mulf %21, %22 : vector<1x128xf32>
      %c0_14 = arith.constant 0 : index
      %c0_15 = arith.constant 0 : index
      %24 = vector.load %arg4[%c0_14, %c0_15] : memref<2x128xf32, #tpu.memory_space<vmem>>, vector<1x128xf32>
      %c1 = arith.constant 1 : index
      %c0_16 = arith.constant 0 : index
      %25 = vector.load %arg4[%c1, %c0_16] : memref<2x128xf32, #tpu.memory_space<vmem>>, vector<1x128xf32>
      %cst_17 = arith.constant 9.99999974E-6 : f32
      %26 = vector.broadcast %cst_17 : f32 to vector<1x128xf32>
      %27 = arith.addf %23, %26 : vector<1x128xf32>
      %28 = math.rsqrt %27 : vector<1x128xf32>
      %29 = arith.mulf %24, %28 : vector<1x128xf32>
      %30 = arith.mulf %16, %29 : vector<1x128xf32>
      %31 = arith.subf %25, %30 : vector<1x128xf32>
      %32 = vector.broadcast %29 : vector<1x128xf32> to vector<8x128xf32>
      %33 = arith.mulf %12, %32 : vector<8x128xf32>
      %34 = vector.broadcast %31 : vector<1x128xf32> to vector<8x128xf32>
      %35 = arith.addf %33, %34 : vector<8x128xf32>
      %cst_18 = arith.constant 0.000000e+00 : f32
      %36 = vector.broadcast %cst_18 : f32 to vector<8x128xf32>
      %37 = arith.cmpf oge, %35, %36 : vector<8x128xf32>
      %cst_19 = arith.constant 0.00999999977 : f32
      %38 = vector.broadcast %cst_19 : f32 to vector<8x128xf32>
      %39 = arith.mulf %38, %35 : vector<8x128xf32>
      %40 = arith.select %37, %35, %39 : vector<8x128xi1>, vector<8x128xf32>
      %c0_20 = arith.constant 0 : index
      %c0_21 = arith.constant 0 : index
      %41 = vector.load %arg5[%c0_20, %c0_21] : memref<8x128xf32, #tpu.memory_space<vmem>>, vector<8x128xf32>
      tpu.vector_store %arg5[%c0_20, %c0_21], %40 {strides = array<i32>} : memref<8x128xf32, #tpu.memory_space<vmem>>, vector<8x128xf32>,
    } else {
    }
    return
  }
  func.func @transform_0(%arg0: i32, %arg1: i32) -> (i32, i32) {
    %c0_i32 = arith.constant 0 : i32
    %c0_i32_0 = arith.constant 0 : i32
    return %c0_i32, %arg1 : i32, i32
  }
  func.func @transform_1(%arg0: i32, %arg1: i32) -> (i32, i32) {
    %c0_i32 = arith.constant 0 : i32
    return %arg1, %arg0 : i32, i32
  }
  func.func @transform_2(%arg0: i32, %arg1: i32) -> (i32, i32) {
    %c0_i32 = arith.constant 0 : i32
    %c0_i32_0 = arith.constant 0 : i32
    return %c0_i32, %arg0 : i32, i32
  }
  func.func @transform_3(%arg0: i32, %arg1: i32) -> (i32, i32) {
    %c0_i32 = arith.constant 0 : i32
    %c0_i32_0 = arith.constant 0 : i32
    return %c0_i32, %arg0 : i32, i32
  }
}

</mosaic_0001>

<llo_original>
// kernel: _apply.1
$region0: #{_apply.1}
  #allocation0 [shape = 'u32[]', space=smem, size = 0x4, offset = 0x4, fixed_abs, tag = 'smem constant byte address 0x4 - core index']
  #allocation1 [shape = 'u32[144,128]{1,0:T(1,128)}', space=vmem, size = 0x12000, scoped, tag = 'internal scratch']
  %s0 = inlined_call_operand.vmem [shape: f32[8,128], index: 0, kind: input, shape index: {}]
  %s1 = inlined_call_operand.hbm [shape: f32[128,128], index: 1, kind: input, shape index: {}]
  %s2 = inlined_call_operand.vmem [shape: f32[2,128], index: 2, kind: input, shape index: {}]
  %s3 = inlined_call_operand.hbm [shape: f32[8,128], index: 3, kind: output, shape index: {}]
  %s4 = sld [smem:[#allocation0]]
  $region38: #{_apply.1} parent=0
    _
  %s6 = ssub.s32 1, %s4
  %s7 = scalar_select 0, %s6, %s4
  $region1: #{_apply.1} parent=0
    #allocation2 [shape = 'u8[65536]{0}', space=vmem, size = 0x10000, scoped, tag = 'input window, operand 1, single buffered']
    #allocation3 [shape = 's32[1]{0}', space=sflag, size = 0x4, scoped, tag = 'scoped memory for _apply.1']
    #allocation4 [shape = 's32[1]{0}', space=sflag, size = 0x4, scoped, tag = 'scoped memory for _apply.1']
    #allocation5 [shape = 'u8[4096]{0}', space=vmem, size = 0x1000, scoped, tag = 'output window, operand 0, single buffered']
    %8 = vsyncpa [#allocation3], 0
    %9 = vsyncpa [#allocation4], 0
    // Predicated region
    $region2: #{_apply.1} parent=1 // pred_check
      _
    $region3: #{_apply.1} parent=1 // pred_check_branch
      %11 = sbr.rel (0) target = $region5
    $region4: #{_apply.1} parent=1 // pred_region
      _
    $region5: #{_apply.1} parent=1 // pred_fallthru
      _
    // Predicated region
    $region6: #{_apply.1} parent=1 // pred_check
      _
    $region7: #{_apply.1} parent=1 // pred_check_branch
      %13 = sbr.rel (0) target = $region9
    $region8: #{_apply.1} parent=1 // pred_region
      %s15 = ssub.s32 2048, 2048
      %16 = vsyncadd [#allocation3], %s15
      %s17 = sshll.u32 [#allocation2], 4
      %s18 = int_to_ptr.vmem [resolvable:$true] %s17
      %23 = dma.hbm_to_vmem [thread:$0]  %s1, 2048, %s18, [#allocation3], 128, 128, 8
    $region9: #{_apply.1} parent=1 // pred_fallthru
      _
    // Predicated region
    $region10: #{_apply.1} parent=1 // pred_check
      _
    $region11: #{_apply.1} parent=1 // pred_check_branch
      %25 = sbr.rel (0) target = $region13
    $region12: #{_apply.1} parent=1 // pred_region
      _
    $region13: #{_apply.1} parent=1 // pred_fallthru
      _
    // Predicated region
    $region14: #{_apply.1} parent=1 // pred_check
      _
    $region15: #{_apply.1} parent=1 // pred_check_branch
      %27 = sbr.rel (0) target = $region17
    $region16: #{_apply.1} parent=1 // pred_region
      %28 = dma.done [#allocation3], 2048
    $region17: #{_apply.1} parent=1 // pred_fallthru
      _
    %v29 = vld [vmem:[%s0] sm:$0xff]
    %v30 = vld [vmem:[#allocation2] sm:$0xff]
    %v31 = vld [vmem:[#allocation2 + $0x8] sm:$0xff]
    %v32 = vld [vmem:[#allocation2 + $0x10] sm:$0xff]
    %v33 = vld [vmem:[#allocation2 + $0x18] sm:$0xff]
    %v34 = vld [vmem:[#allocation2 + $0x20] sm:$0xff]
    %v35 = vld [vmem:[#allocation2 + $0x28] sm:$0xff]
    %v36 = vld [vmem:[#allocation2 + $0x30] sm:$0xff]
    %v37 = vld [vmem:[#allocation2 + $0x38] sm:$0xff]
    %v38 = vld [vmem:[#allocation2 + $0x40] sm:$0xff]
    %v39 = vld [vmem:[#allocation2 + $0x48] sm:$0xff]
    %v40 = vld [vmem:[#allocation2 + $0x50] sm:$0xff]
    %v41 = vld [vmem:[#allocation2 + $0x58] sm:$0xff]
    %v42 = vld [vmem:[#allocation2 + $0x60] sm:$0xff]
    %v43 = vld [vmem:[#allocation2 + $0x68] sm:$0xff]
    %v44 = vld [vmem:[#allocation2 + $0x70] sm:$0xff]
    %v45 = vld [vmem:[#allocation2 + $0x78] sm:$0xff]
    %46 = vmatprep.subr.mxu0 0.0
    %47 = vmatpush1.msra.mxu0 %v45
    %48 = vmatprep.subr.mxu0 0.0
    %49 = vmatpush1.msra.mxu0 %v44
    %50 = vmatprep.subr.mxu0 0.0
    %51 = vmatpush1.msra.mxu0 %v43
    %52 = vmatprep.subr.mxu0 0.0
    %53 = vmatpush1.msra.mxu0 %v42
    %54 = vmatprep.subr.mxu0 0.0
    %55 = vmatpush1.msra.mxu0 %v41
    %56 = vmatprep.subr.mxu0 0.0
    %57 = vmatpush1.msra.mxu0 %v40
    %58 = vmatprep.subr.mxu0 0.0
    %59 = vmatpush1.msra.mxu0 %v39
    %60 = vmatprep.subr.mxu0 0.0
    %61 = vmatpush1.msra.mxu0 %v38
    %62 = vmatprep.subr.mxu0 0.0
    %63 = vmatpush1.msra.mxu0 %v37
    %64 = vmatprep.subr.mxu0 0.0
    %65 = vmatpush1.msra.mxu0 %v36
    %66 = vmatprep.subr.mxu0 0.0
    %67 = vmatpush1.msra.mxu0 %v35
    %68 = vmatprep.subr.mxu0 0.0
    %69 = vmatpush1.msra.mxu0 %v34
    %70 = vmatprep.subr.mxu0 0.0
    %71 = vmatpush1.msra.mxu0 %v33
    %72 = vmatprep.subr.mxu0 0.0
    %73 = vmatpush1.msra.mxu0 %v32
    %74 = vmatprep.subr.mxu0 0.0
    %75 = vmatpush1.msra.mxu0 %v31
    %76 = vmatprep.subr.mxu0 0.0
    %77 = vmatpush1.msra.mxu0 %v30
    %78 = vmatprep.subr.mxu0 0.0
    %79 = vmatpush2.msra.mxu0 0.0
    %80 = vmatprep.subr.mxu0 0.0
    %81 = vmatpush2.msra.mxu0 0.0
    %82 = vmatprep.subr.mxu0 0.0
    %83 = vmatpush2.msra.mxu0 0.0
    %84 = vmatprep.subr.mxu0 0.0
    %85 = vmatpush2.msra.mxu0 0.0
    %86 = vmatprep.subr.mxu0 0.0
    %87 = vmatpush2.msra.mxu0 0.0
    %88 = vmatprep.subr.mxu0 0.0
    %89 = vmatpush2.msra.mxu0 0.0
    %90 = vmatprep.subr.mxu0 0.0
    %91 = vmatpush2.msra.mxu0 0.0
    %92 = vmatprep.subr.mxu0 0.0
    %93 = vmatpush2.msra.mxu0 0.0
    %94 = vmatprep.subr.mxu0 0.0
    %95 = vmatpush2.msra.mxu0 0.0
    %96 = vmatprep.subr.mxu0 0.0
    %97 = vmatpush2.msra.mxu0 0.0
    %98 = vmatprep.subr.mxu0 0.0
    %99 = vmatpush2.msra.mxu0 0.0
    %100 = vmatprep.subr.mxu0 0.0
    %101 = vmatpush2.msra.mxu0 0.0
    %102 = vmatprep.subr.mxu0 0.0
    %103 = vmatpush2.msra.mxu0 0.0
    %104 = vmatprep.subr.mxu0 0.0
    %105 = vmatpush2.msra.mxu0 0.0
    %106 = vmatprep.subr.mxu0 0.0
    %107 = vmatpush2.msra.mxu0 0.0
    %108 = vmatprep.subr.mxu0 0.0
    %109 = vmatpush2.msra.mxu0 0.0
    %110 = vmatprep.mubr.f32.mxu0 0.0
    %111 = vmatmul.mubr.f32.gmra.mxu0 %v29
    %v112 = vpop.f32.mrf.mxu0
    %v113 = vadd.f32 0.0, %v112
    %v114 = vpop.f32.mrf.mxu0
    %115 = vdwg.mxu0
    %p116 = scmp.eq.s32.totalorder 0, 0
    // Predicated region
    $region18: #{_apply.1} parent=1 // pred_check
      %p117 = pneg %p116
    $region19: #{_apply.1} parent=1 // pred_check_branch
      %119 = sbr.rel (%p117) target = $region21
    $region20: #{_apply.1} parent=1 // pred_region
      %120 = vst [vmem:[#allocation5] sm:$0xff] %v113
    $region21: #{_apply.1} parent=1 // pred_fallthru
      _
    %p121 = scmp.gt.s32.totalorder 0, 0
    // Predicated region
    $region22: #{_apply.1} parent=1 // pred_check
      %p122 = pneg %p121
    $region23: #{_apply.1} parent=1 // pred_check_branch
      %124 = sbr.rel (%p122) target = $region25
    $region24: #{_apply.1} parent=1 // pred_region
      %v125 = vld [vmem:[#allocation5] sm:$0xff]
      %v126 = vadd.f32 %v125, %v113
      %127 = vst [vmem:[#allocation5] sm:$0xff] %v126
    $region25: #{_apply.1} parent=1 // pred_fallthru
      _
    // Predicated region
    $region26: #{_apply.1} parent=1 // pred_check
      %p128 = pneg %p116
    $region27: #{_apply.1} parent=1 // pred_check_branch
      %130 = sbr.rel (%p128) target = $region29
    $region28: #{_apply.1} parent=1 // pred_region
      %v131 = vld [vmem:[#allocation5] sm:$0xff]
      %v132 = vrot.slane %v131, 4
      %v133 = vadd.f32 %v131, %v132
      %v134 = vrot.slane %v133, 2
      %v135 = vadd.f32 %v133, %v134
      %v136 = vrot.slane %v135, 1
      %v137 = vadd.f32 %v135, %v136
      %v138 = vmul.f32 %v137, 0.125
      %v139 = vsub.f32 %v131, %v138
      %v140 = vmul.f32 %v139, %v139
      %v141 = vrot.slane %v140, 4
      %v142 = vadd.f32 %v140, %v141
      %v143 = vrot.slane %v142, 2
      %v144 = vadd.f32 %v142, %v143
      %v145 = vrot.slane %v144, 1
      %v146 = vadd.f32 %v144, %v145
      %v147 = vmul.f32 %v146, 0.125
      %v148 = vld [vmem:[%s2] sm:$0x1]
      %v149 = vld [vmem:[%s2 + $0x1] sm:$0x1]
      %v150 = vadd.f32 %v147, 1e-05
      %v151 = vrsqrt.pop %v150
      %v152 = vmul.f32 %v148, %v151
      %v153 = vmul.f32 %v138, %v152
      %v154 = vsub.f32 %v149, %v153
      %v155 = vlaneseq
      %v156 = vshrl.u32 %v155, 7
      %v157 = vsub.s32 0, %v156
      %v158 = vrot.slane %v152, %v157
      %v159 = vmul.f32 %v131, %v158
      %v160 = vlaneseq
      %v161 = vshrl.u32 %v160, 7
      %v162 = vsub.s32 0, %v161
      %v163 = vrot.slane %v154, %v162
      %v164 = vadd.f32 %v159, %v163
      %vm165 = vcmp.ge.f32.partialorder %v164, 0.0
      %v166 = vmul.f32 %v164, 0.01
      %v167 = vsel %vm165, %v164, %v166
      %168 = vst [vmem:[#allocation5] sm:$0xff] %v167
    $region29: #{_apply.1} parent=1 // pred_fallthru
      _
    // Predicated region
    $region30: #{_apply.1} parent=1 // pred_check
      _
    $region31: #{_apply.1} parent=1 // pred_check_branch
      %170 = sbr.rel (0) target = $region33
    $region32: #{_apply.1} parent=1 // pred_region
      %s172 = ssub.s32 128, 128
      %173 = vsyncadd [#allocation4], %s172
      %s175 = sshll.u32 [#allocation5], 4
      %s176 = int_to_ptr.vmem [resolvable:$true] %s175
      %178 = dma.vmem_to_hbm [thread:$0]  %s176, 128, %s3, [#allocation4]
    $region33: #{_apply.1} parent=1 // pred_fallthru
      _
    // Predicated region
    $region34: #{_apply.1} parent=1 // pred_check
      _
    $region35: #{_apply.1} parent=1 // pred_check_branch
      %180 = sbr.rel (0) target = $region37
    $region36: #{_apply.1} parent=1 // pred_region
      %181 = dma.done [#allocation4], 128
    $region37: #{_apply.1} parent=1 // pred_fallthru
      _
    %182 = vsyncpa [#allocation3], 1
    %183 = vsyncpa [#allocation4], 1

</llo_original>
